<compile_context>
chip_gen: v7x
topology: tpu7x:2x2x1
jax: 0.10.0
libtpu: 0.0.40
codegen_flags: <defaults>
</compile_context>

<pallas_src>
import jax
import jax.numpy as jnp
from jax.experimental import pallas as pl
from jax.experimental.pallas import tpu as pltpu

N_PROTEINS = 32                     # len(protein_dict)
IN_FEATURES = N_PROTEINS + 2        # 34  (one_hot_all_labels=False path)
HIDDEN = 128                        # hidden_layers=[128]
CONTEXT_DIM = 128                   # output_size_context_dim
SIZE0 = 20.0                        # size_dict[0]
SIZE1 = 31.0                        # size_dict[1]
DEFAULT_TILE_B = 512                # batch rows per grid step (multiple of 128)


def _round_up(x, m):
    return ((x + m - 1) // m) * m


def _mca_embed_kernel(f01_ref, mh_ref, w1_ref, b1_ref, w2_ref, b2_ref, out_ref):
    tb = f01_ref.shape[0]

    # Build the (tb, 34) feature tile:
    #   col 0 -> frame / 20, col 1 -> label1 / 31, cols 2.. -> batch-shared multi-hot.
    col = jax.lax.broadcasted_iota(jnp.int32, (tb, IN_FEATURES), 1)
    mh = jnp.broadcast_to(mh_ref[...], (tb, IN_FEATURES))          # (tb, 34) f32
    f0 = f01_ref[:, 0:1]                                           # (tb, 1) f32
    f1 = f01_ref[:, 1:2]                                           # (tb, 1) f32
    feats = jnp.where(col == 0, f0, jnp.where(col == 1, f1, mh))   # (tb, 34) f32

    # Linear -> ReLU -> Linear.  bf16 MXU inputs, f32 accumulation, f32 bias/ReLU.
    h = jnp.dot(feats.astype(jnp.bfloat16), w1_ref[...],
                preferred_element_type=jnp.float32) + b1_ref[...]
    h = jnp.maximum(h, 0.0)
    out = jnp.dot(h.astype(jnp.bfloat16), w2_ref[...],
                  preferred_element_type=jnp.float32) + b2_ref[...]
    out_ref[...] = out.astype(out_ref.dtype)


def mca_condition_embedder(labels, params, tile_b=DEFAULT_TILE_B):
    """Pallas equivalent of MCAConditionEmbedder.forward (default config).

    labels: (B, 3) int array.  Returns {'c_crossattn': [(B, CONTEXT_DIM) f32]}.
    """
    w1, b1, w2, b2 = params
    labels = labels.astype(jnp.int32)
    B = labels.shape[0]

    # Hoisted batch-shared multi-hot (torch: new_labels[:, labels[:,2]+2] = 1 for ALL
    # rows).  Tiny O(B) XLA scatter; passing it in keeps batch tiling correct.
    # NOTE: assumes labels[:, 2] + 2 in [2, IN_FEATURES), as the torch module does.
    multi_hot = jnp.zeros((IN_FEATURES,), jnp.float32).at[labels[:, 2] + 2].set(1.0)
    multi_hot = multi_hot.reshape(1, IN_FEATURES)

    # Dense per-row scalar features (f32), replacing the lane-sparse (B, 3) int input.
    f01 = jnp.stack(
        [labels[:, 0].astype(jnp.float32) / SIZE0,
         labels[:, 1].astype(jnp.float32) / SIZE1],
        axis=1,
    )  # (B, 2) f32

    # Batch tiling (pad B up to a multiple of the tile; padded rows are sliced off).
    tb = min(int(tile_b), _round_up(B, 8))
    tb = _round_up(tb, 8)
    Bp = _round_up(B, tb)
    if Bp != B:
        f01 = jnp.pad(f01, ((0, Bp - B), (0, 0)))

    grid = (Bp // tb,)

    cost = pl.CostEstimate(
        flops=2 * Bp * (IN_FEATURES * HIDDEN + HIDDEN * CONTEXT_DIM),
        transcendentals=0,
        bytes_accessed=(Bp * (2 * 4 + CONTEXT_DIM * 4)          # f01 in, out
                        + IN_FEATURES * 4                        # multi-hot
                        + (IN_FEATURES * HIDDEN + HIDDEN * CONTEXT_DIM) * 2  # bf16 W
                        + (HIDDEN + CONTEXT_DIM) * 4),           # f32 biases
    )

    out = pl.pallas_call(
        _mca_embed_kernel,
        out_shape=jax.ShapeDtypeStruct((Bp, CONTEXT_DIM), jnp.float32),
        grid=grid,
        in_specs=[
            pl.BlockSpec((tb, 2), lambda i: (i, 0)),                    # f01 (tiled)
            pl.BlockSpec((1, IN_FEATURES), lambda i: (0, 0)),           # multi-hot
            pl.BlockSpec((IN_FEATURES, HIDDEN), lambda i: (0, 0)),      # w1 (resident)
            pl.BlockSpec((1, HIDDEN), lambda i: (0, 0)),                # b1 (resident)
            pl.BlockSpec((HIDDEN, CONTEXT_DIM), lambda i: (0, 0)),      # w2 (resident)
            pl.BlockSpec((1, CONTEXT_DIM), lambda i: (0, 0)),           # b2 (resident)
        ],
        out_specs=pl.BlockSpec((tb, CONTEXT_DIM), lambda i: (i, 0)),
        compiler_params=pltpu.CompilerParams(
            dimension_semantics=("parallel",),   # v7x: shard batch grid across 2 TCs
        ),
        cost_estimate=cost,
    )(f01, multi_hot, w1, b1, w2, b2)

    if Bp != B:
        out = out[:B]

    # TODO(synk): at small B this call is launch-overhead bound; fuse into the
    # downstream cross-attention/conditioning kernel for a real win there.
    # TODO(synk): concat_mode / image_embedding_model branch and the
    # one_hot_all_labels=True path are not implemented (module defaults are False).
    return {'c_crossattn': [out]}


def init_params(key):
    """PyTorch-Linear-style init U(-1/sqrt(fan_in), 1/sqrt(fan_in)).

    Weights stored bf16 (MXU inputs), biases f32 (added after f32 accumulation).
    """
    k1, k2, k3, k4 = jax.random.split(key, 4)
    bound1 = 1.0 / jnp.sqrt(jnp.float32(IN_FEATURES))
    bound2 = 1.0 / jnp.sqrt(jnp.float32(HIDDEN))
    w1 = jax.random.uniform(k1, (IN_FEATURES, HIDDEN), jnp.float32, -bound1, bound1)
    b1 = jax.random.uniform(k2, (1, HIDDEN), jnp.float32, -bound1, bound1)
    w2 = jax.random.uniform(k3, (HIDDEN, CONTEXT_DIM), jnp.float32, -bound2, bound2)
    b2 = jax.random.uniform(k4, (1, CONTEXT_DIM), jnp.float32, -bound2, bound2)
    return w1.astype(jnp.bfloat16), b1, w2.astype(jnp.bfloat16), b2


def reference_forward(labels, params):
    """Pure-JAX reference replicating the torch semantics (same bf16 matmul inputs)."""
    w1, b1, w2, b2 = params
    labels = labels.astype(jnp.int32)
    B = labels.shape[0]
    # torch: new_labels[:, labels[:, 2] + 2] = 1   (all rows, those columns)
    cols_hit = jnp.zeros((IN_FEATURES,), jnp.float32).at[labels[:, 2] + 2].set(1.0)
    feats = jnp.broadcast_to(cols_hit[None, :], (B, IN_FEATURES))
    feats = feats.at[:, 0].set(labels[:, 0].astype(jnp.float32) / SIZE0)
    feats = feats.at[:, 1].set(labels[:, 1].astype(jnp.float32) / SIZE1)
    h = jnp.dot(feats.astype(jnp.bfloat16), w1, preferred_element_type=jnp.float32) + b1
    h = jnp.maximum(h, 0.0)
    return jnp.dot(h.astype(jnp.bfloat16), w2, preferred_element_type=jnp.float32) + b2


if __name__ == "__main__":
    key = jax.random.PRNGKey(0)
    k_params, k0, k1, k2 = jax.random.split(key, 4)

    params = init_params(k_params)

    # --- Test 1: small batch (single grid step) ---
    B = 8
    labels = jnp.stack(
        [
            jax.random.randint(k0, (B,), 0, 20, dtype=jnp.int32),    # frame  in [0, 20)
            jax.random.randint(k1, (B,), 0, 31, dtype=jnp.int32),    # label1 in [0, 31)
            jax.random.randint(k2, (B,), 0, N_PROTEINS, jnp.int32),  # protein index
        ],
        axis=1,
    )  # (B, 3) int32

    cond = mca_condition_embedder(labels, params)
    emb = cond['c_crossattn'][0]
    jax.block_until_ready(emb)

    ref = reference_forward(labels, params)
    assert emb.shape == (B, CONTEXT_DIM)
    assert jnp.allclose(emb, ref, atol=1e-2, rtol=1e-2), "mismatch vs reference (B=8)"

    # --- Test 2: non-multiple batch with a multi-step grid (exercises tiling/padding) ---
    B2 = 13
    k3, k4, k5 = jax.random.split(jax.random.PRNGKey(1), 3)
    labels2 = jnp.stack(
        [
            jax.random.randint(k3, (B2,), 0, 20, dtype=jnp.int32),
            jax.random.randint(k4, (B2,), 0, 31, dtype=jnp.int32),
            jax.random.randint(k5, (B2,), 0, N_PROTEINS, jnp.int32),
        ],
        axis=1,
    )
    emb2 = mca_condition_embedder(labels2, params, tile_b=8)['c_crossattn'][0]
    jax.block_until_ready(emb2)
    ref2 = reference_forward(labels2, params)
    assert emb2.shape == (B2, CONTEXT_DIM)
    assert jnp.allclose(emb2, ref2, atol=1e-2, rtol=1e-2), "mismatch vs reference (B=13)"

    print("KERNEL_OK")
</pallas_src>

<mosaic_0001>
module attributes {stable_mosaic.version = 11 : i64} {
  func.func @_mca_embed_kernel(%arg0: i32, %arg1: memref<8x2xf32, #tpu.memory_space<vmem>>, %arg2: memref<1x34xf32, #tpu.memory_space<vmem>>, %arg3: memref<34x128xbf16, #tpu.memory_space<vmem>>, %arg4: memref<1x128xf32, #tpu.memory_space<vmem>>, %arg5: memref<128x128xbf16, #tpu.memory_space<vmem>>, %arg6: memref<1x128xf32, #tpu.memory_space<vmem>>, %arg7: memref<8x128xf32, #tpu.memory_space<vmem>>) attributes {dimension_semantics = [#tpu.dimension_semantics<parallel>], iteration_bounds = array<i64: 1>, scalar_prefetch = 0 : i64, scratch_operands = 0 : i64, tpu.core_type = #tpu.core_type<tc>, window_params = [{transform_indices = @transform_0, window_bounds = array<i64: 8, 2>}, {pipeline_mode = #tpu.pipeline_mode<synchronous>, transform_indices = @transform_1, window_bounds = array<i64: 1, 34>}, {pipeline_mode = #tpu.pipeline_mode<synchronous>, transform_indices = @transform_2, window_bounds = array<i64: 34, 128>}, {pipeline_mode = #tpu.pipeline_mode<synchronous>, transform_indices = @transform_3, window_bounds = array<i64: 1, 128>}, {pipeline_mode = #tpu.pipeline_mode<synchronous>, transform_indices = @transform_4, window_bounds = array<i64: 128, 128>}, {pipeline_mode = #tpu.pipeline_mode<synchronous>, transform_indices = @transform_5, window_bounds = array<i64: 1, 128>}, {transform_indices = @transform_6, window_bounds = array<i64: 8, 128>}]} {
    %0 = tpu.iota {dimensions = array<i32: 1>} : vector<8x34xi32>
    %c0 = arith.constant 0 : index
    %c0_0 = arith.constant 0 : index
    %1 = vector.load %arg2[%c0, %c0_0] : memref<1x34xf32, #tpu.memory_space<vmem>>, vector<1x34xf32>
    %2 = vector.shape_cast %1 : vector<1x34xf32> to vector<1x34xf32>
    %3 = vector.broadcast %2 : vector<1x34xf32> to vector<8x34xf32>
    %c0_1 = arith.constant 0 : index
    %c0_2 = arith.constant 0 : index
    %4 = vector.load %arg1[%c0_1, %c0_2] : memref<8x2xf32, #tpu.memory_space<vmem>>, vector<8x1xf32>
    %c0_3 = arith.constant 0 : index
    %c1 = arith.constant 1 : index
    %5 = vector.load %arg1[%c0_3, %c1] : memref<8x2xf32, #tpu.memory_space<vmem>>, vector<8x1xf32>
    %c0_i32 = arith.constant 0 : i32
    %6 = vector.broadcast %c0_i32 : i32 to vector<8x34xi32>
    %7 = arith.cmpi eq, %0, %6 : vector<8x34xi32>
    %c1_i32 = arith.constant 1 : i32
    %8 = vector.broadcast %c1_i32 : i32 to vector<8x34xi32>
    %9 = arith.cmpi eq, %0, %8 : vector<8x34xi32>
    %10 = vector.shape_cast %5 : vector<8x1xf32> to vector<8x1xf32>
    %11 = vector.broadcast %10 : vector<8x1xf32> to vector<8x34xf32>
    %12 = arith.select %9, %11, %3 : vector<8x34xi1>, vector<8x34xf32>
    %13 = vector.shape_cast %4 : vector<8x1xf32> to vector<8x1xf32>
    %14 = vector.broadcast %13 : vector<8x1xf32> to vector<8x34xf32>
    %15 = arith.select %7, %14, %12 : vector<8x34xi1>, vector<8x34xf32>
    %16 = arith.truncf %15 : vector<8x34xf32> to vector<8x34xbf16>
    %c0_4 = arith.constant 0 : index
    %c0_5 = arith.constant 0 : index
    %17 = vector.load %arg3[%c0_4, %c0_5] : memref<34x128xbf16, #tpu.memory_space<vmem>>, vector<34x128xbf16>
    %cst = arith.constant dense<0.000000e+00> : vector<8x128xf32>
    %18 = tpu.matmul %16, %17, %cst {dimension_numbers = #tpu.dot_dimension_numbers<[1], [0], [0], [1], [0, 0, 1, 1], [], []>} : vector<8x34xbf16>, vector<34x128xbf16>, vector<8x128xf32> -> vector<8x128xf32>
    %c0_6 = arith.constant 0 : index
    %c0_7 = arith.constant 0 : index
    %19 = vector.load %arg4[%c0_6, %c0_7] : memref<1x128xf32, #tpu.memory_space<vmem>>, vector<1x128xf32>
    %20 = vector.broadcast %19 : vector<1x128xf32> to vector<8x128xf32>
    %21 = arith.addf %18, %20 : vector<8x128xf32>
    %cst_8 = arith.constant 0.000000e+00 : f32
    %22 = vector.broadcast %cst_8 : f32 to vector<8x128xf32>
    %23 = arith.maximumf %21, %22 : vector<8x128xf32>
    %24 = arith.truncf %23 : vector<8x128xf32> to vector<8x128xbf16>
    %c0_9 = arith.constant 0 : index
    %c0_10 = arith.constant 0 : index
    %25 = vector.load %arg5[%c0_9, %c0_10] : memref<128x128xbf16, #tpu.memory_space<vmem>>, vector<128x128xbf16>
    %cst_11 = arith.constant dense<0.000000e+00> : vector<8x128xf32>
    %26 = tpu.matmul %24, %25, %cst_11 {dimension_numbers = #tpu.dot_dimension_numbers<[1], [0], [0], [1], [0, 0, 1, 1], [], []>} : vector<8x128xbf16>, vector<128x128xbf16>, vector<8x128xf32> -> vector<8x128xf32>
    %c0_12 = arith.constant 0 : index
    %c0_13 = arith.constant 0 : index
    %27 = vector.load %arg6[%c0_12, %c0_13] : memref<1x128xf32, #tpu.memory_space<vmem>>, vector<1x128xf32>
    %28 = vector.broadcast %27 : vector<1x128xf32> to vector<8x128xf32>
    %29 = arith.addf %26, %28 : vector<8x128xf32>
    %c0_14 = arith.constant 0 : index
    %c0_15 = arith.constant 0 : index
    %30 = vector.load %arg7[%c0_14, %c0_15] : memref<8x128xf32, #tpu.memory_space<vmem>>, vector<8x128xf32>
    tpu.vector_store %arg7[%c0_14, %c0_15], %29 {strides = array<i32>} : memref<8x128xf32, #tpu.memory_space<vmem>>, vector<8x128xf32>,
    return
  }
  func.func @transform_0(%arg0: i32) -> (i32, i32) {
    %c0_i32 = arith.constant 0 : i32
    %c0_i32_0 = arith.constant 0 : i32
    return %arg0, %c0_i32 : i32, i32
  }
  func.func @transform_1(%arg0: i32) -> (i32, i32) {
    %c0_i32 = arith.constant 0 : i32
    %c0_i32_0 = arith.constant 0 : i32
    %c0_i32_1 = arith.constant 0 : i32
    return %c0_i32, %c0_i32_0 : i32, i32
  }
  func.func @transform_2(%arg0: i32) -> (i32, i32) {
    %c0_i32 = arith.constant 0 : i32
    %c0_i32_0 = arith.constant 0 : i32
    %c0_i32_1 = arith.constant 0 : i32
    return %c0_i32, %c0_i32_0 : i32, i32
  }
  func.func @transform_3(%arg0: i32) -> (i32, i32) {
    %c0_i32 = arith.constant 0 : i32
    %c0_i32_0 = arith.constant 0 : i32
    %c0_i32_1 = arith.constant 0 : i32
    return %c0_i32, %c0_i32_0 : i32, i32
  }
  func.func @transform_4(%arg0: i32) -> (i32, i32) {
    %c0_i32 = arith.constant 0 : i32
    %c0_i32_0 = arith.constant 0 : i32
    %c0_i32_1 = arith.constant 0 : i32
    return %c0_i32, %c0_i32_0 : i32, i32
  }
  func.func @transform_5(%arg0: i32) -> (i32, i32) {
    %c0_i32 = arith.constant 0 : i32
    %c0_i32_0 = arith.constant 0 : i32
    %c0_i32_1 = arith.constant 0 : i32
    return %c0_i32, %c0_i32_0 : i32, i32
  }
  func.func @transform_6(%arg0: i32) -> (i32, i32) {
    %c0_i32 = arith.constant 0 : i32
    %c0_i32_0 = arith.constant 0 : i32
    return %arg0, %c0_i32 : i32, i32
  }
}

</mosaic_0001>

<llo_original>
// kernel: tpu_custom_call.1
$region0: #{tpu_custom_call.1}
  #allocation0 [shape = 'u32[]', space=smem, size = 0x4, offset = 0x4, fixed_abs, tag = 'smem constant byte address 0x4 - core index']
  #allocation1 [shape = 'u32[144,128]{1,0:T(1,128)}', space=vmem, size = 0x12000, scoped, tag = 'internal scratch']
  %s0 = inlined_call_operand.vmem [shape: f32[8,2], index: 0, kind: input, shape index: {}]
  %s1 = inlined_call_operand.vmem [shape: f32[1,34], index: 1, kind: input, shape index: {}]
  %s2 = inlined_call_operand.hbm [shape: bf16[34,128], index: 2, kind: input, shape index: {}]
  %s3 = inlined_call_operand.vmem [shape: f32[1,128], index: 3, kind: input, shape index: {}]
  %s4 = inlined_call_operand.hbm [shape: bf16[128,128], index: 4, kind: input, shape index: {}]
  %s5 = inlined_call_operand.vmem [shape: f32[1,128], index: 5, kind: input, shape index: {}]
  %s6 = inlined_call_operand.hbm [shape: f32[8,128], index: 6, kind: output, shape index: {}]
  %s7 = sld [smem:[#allocation0]]
  $region42: #{tpu_custom_call.1} parent=0
    _
  %s9 = ssub.s32 1, %s7
  %s10 = scalar_select 0, %s9, %s7
  $region1: #{tpu_custom_call.1} parent=0
    #allocation2 [shape = 'u8[10240]{0}', space=vmem, size = 0x2800, scoped, tag = 'input window, operand 2, single buffered']
    #allocation3 [shape = 's32[1]{0}', space=sflag, size = 0x4, scoped, tag = 'scoped memory for tpu_custom_call.1']
    #allocation4 [shape = 's32[1]{0}', space=sflag, size = 0x4, scoped, tag = 'scoped memory for tpu_custom_call.1']
    #allocation5 [shape = 'u8[32768]{0}', space=vmem, size = 0x8000, scoped, tag = 'input window, operand 4, single buffered']
    #allocation6 [shape = 's32[1]{0}', space=sflag, size = 0x4, scoped, tag = 'scoped memory for tpu_custom_call.1']
    #allocation7 [shape = 'u8[4096]{0}', space=vmem, size = 0x1000, scoped, tag = 'output window, operand 0, single buffered']
    %11 = vsyncpa [#allocation3], 0
    %12 = vsyncpa [#allocation6], 0
    %13 = vsyncpa [#allocation4], 0
    // Predicated region
    $region2: #{tpu_custom_call.1} parent=1 // pred_check
      _
    $region3: #{tpu_custom_call.1} parent=1 // pred_check_branch
      %15 = sbr.rel (0) target = $region5
    $region4: #{tpu_custom_call.1} parent=1 // pred_region
      _
    $region5: #{tpu_custom_call.1} parent=1 // pred_fallthru
      _
    // Predicated region
    $region6: #{tpu_custom_call.1} parent=1 // pred_check
      _
    $region7: #{tpu_custom_call.1} parent=1 // pred_check_branch
      %17 = sbr.rel (0) target = $region9
    $region8: #{tpu_custom_call.1} parent=1 // pred_region
      _
    $region9: #{tpu_custom_call.1} parent=1 // pred_fallthru
      _
    // Predicated region
    $region10: #{tpu_custom_call.1} parent=1 // pred_check
      _
    $region11: #{tpu_custom_call.1} parent=1 // pred_check_branch
      %19 = sbr.rel (0) target = $region13
    $region12: #{tpu_custom_call.1} parent=1 // pred_region
      %s21 = ssub.s32 320, 320
      %22 = vsyncadd [#allocation3], %s21
      %s23 = sshll.u32 [#allocation2], 4
      %s24 = int_to_ptr.vmem [resolvable:$true] %s23
      %29 = dma.hbm_to_vmem [thread:$0]  %s2, 320, %s24, [#allocation3], 64, 64, 4
    $region13: #{tpu_custom_call.1} parent=1 // pred_fallthru
      _
    // Predicated region
    $region14: #{tpu_custom_call.1} parent=1 // pred_check
      _
    $region15: #{tpu_custom_call.1} parent=1 // pred_check_branch
      %31 = sbr.rel (0) target = $region17
    $region16: #{tpu_custom_call.1} parent=1 // pred_region
      _
    $region17: #{tpu_custom_call.1} parent=1 // pred_fallthru
      _
    // Predicated region
    $region18: #{tpu_custom_call.1} parent=1 // pred_check
      _
    $region19: #{tpu_custom_call.1} parent=1 // pred_check_branch
      %33 = sbr.rel (0) target = $region21
    $region20: #{tpu_custom_call.1} parent=1 // pred_region
      %s35 = ssub.s32 1024, 1024
      %36 = vsyncadd [#allocation6], %s35
      %s37 = sshll.u32 [#allocation5], 4
      %s38 = int_to_ptr.vmem [resolvable:$true] %s37
      %43 = dma.hbm_to_vmem [thread:$0]  %s4, 1024, %s38, [#allocation6], 64, 64, 4
    $region21: #{tpu_custom_call.1} parent=1 // pred_fallthru
      _
    // Predicated region
    $region22: #{tpu_custom_call.1} parent=1 // pred_check
      _
    $region23: #{tpu_custom_call.1} parent=1 // pred_check_branch
      %45 = sbr.rel (0) target = $region25
    $region24: #{tpu_custom_call.1} parent=1 // pred_region
      _
    $region25: #{tpu_custom_call.1} parent=1 // pred_fallthru
      _
    // Predicated region
    $region26: #{tpu_custom_call.1} parent=1 // pred_check
      _
    $region27: #{tpu_custom_call.1} parent=1 // pred_check_branch
      %47 = sbr.rel (0) target = $region29
    $region28: #{tpu_custom_call.1} parent=1 // pred_region
      %48 = dma.done [#allocation3], 320
    $region29: #{tpu_custom_call.1} parent=1 // pred_fallthru
      _
    // Predicated region
    $region30: #{tpu_custom_call.1} parent=1 // pred_check
      _
    $region31: #{tpu_custom_call.1} parent=1 // pred_check_branch
      %50 = sbr.rel (0) target = $region33
    $region32: #{tpu_custom_call.1} parent=1 // pred_region
      %51 = dma.done [#allocation6], 1024
    $region33: #{tpu_custom_call.1} parent=1 // pred_fallthru
      _
    %v53 = vlaneseq
    %v54 = vand.u32 %v53, 127
    %v55 = vld [vmem:[%s1] sm:$0x1]
    %v57 = vlaneseq
    %v58 = vshrl.u32 %v57, 7
    %v59 = vsub.s32 0, %v58
    %v60 = vrot.slane %v55, %v59
    %v62 = vld [vmem:[%s0] sm:$0xff]
    %vm63 = vcmp.eq.s32.totalorder %v54, 0
    %vm64 = vcmp.eq.s32.totalorder %v54, 1
    %66 = vset.pattern.permute.xlu0 1
    %67 = vperm.xlu0 %66, %v62
    %v68 = vpop.permute.xlu0 %67
    %v70 = vsel %vm64, %v68, %v60
    %71 = vset.pattern.permute.xlu0 0
    %72 = vperm.xlu0 %71, %v62
    %v73 = vpop.permute.xlu0 %72
    %v75 = vsel %vm63, %v73, %v70
    %v76 = vpack.c.bf16 %v75, %v75
    %v77 = vld [vmem:[#allocation2] sm:$0xf]
    %v78 = vld [vmem:[#allocation2 + $0x4] sm:$0xf]
    %v79 = vld [vmem:[#allocation2 + $0x8] sm:$0xf]
    %v80 = vld [vmem:[#allocation2 + $0xc] sm:$0xf]
    %v81 = vld [vmem:[#allocation2 + $0x10] sm:$0x1]
    %v82 = vld [vmem:[%s3] sm:$0x1]
    %v84 = vlaneseq
    %v85 = vshrl.u32 %v84, 7
    %v86 = vsub.s32 0, %v85
    %v87 = vrot.slane %v82, %v86
    %v94 = vunpack.c.l.b16 %v77
    %v95 = vunpack.c.l.b16 %v78
    %v96 = vunpack.c.l.b16 %v79
    %v97 = vunpack.c.l.b16 %v80
    %v98 = vunpack.c.l.b16 %v81
    %v99 = vpack.c.b16 %v95, %v94
    %v100 = vpack.c.b16 %v97, %v96
    %v101 = vpack.c.b16 %v98, %v98
    %vm104 = vcmask 277504
    %v106 = vsel %vm104, %v76, 0
    %vm108 = vcmask 1040384
    %v110 = vsel %vm108, %v101, 0
    %112 = vmatprep.subr.bf16.mxu0 0
    %113 = vmatpush1.bf16.msra.mxu0 %v99
    %114 = vmatprep.subr.bf16.mxu0 0
    %115 = vmatpush1.bf16.msra.mxu0 %v100
    %116 = vmatprep.subr.bf16.mxu0 0
    %117 = vmatpush1.bf16.msra.mxu0 %v110
    %118 = vmatprep.subr.bf16.mxu0 0
    %119 = vmatpush1.bf16.msra.mxu0 0
    %120 = vmatprep.subr.bf16.mxu0 0
    %121 = vmatpush1.bf16.msra.mxu0 0
    %122 = vmatprep.subr.bf16.mxu0 0
    %123 = vmatpush1.bf16.msra.mxu0 0
    %124 = vmatprep.subr.bf16.mxu0 0
    %125 = vmatpush1.bf16.msra.mxu0 0
    %126 = vmatprep.subr.bf16.mxu0 0
    %127 = vmatpush1.bf16.msra.mxu0 0
    %128 = vmatprep.subr.bf16.mxu0 0
    %129 = vmatpush1.bf16.msra.mxu0 0
    %130 = vmatprep.subr.bf16.mxu0 0
    %131 = vmatpush1.bf16.msra.mxu0 0
    %132 = vmatprep.subr.bf16.mxu0 0
    %133 = vmatpush1.bf16.msra.mxu0 0
    %134 = vmatprep.subr.bf16.mxu0 0
    %135 = vmatpush1.bf16.msra.mxu0 0
    %136 = vmatprep.subr.bf16.mxu0 0
    %137 = vmatpush1.bf16.msra.mxu0 0
    %138 = vmatprep.subr.bf16.mxu0 0
    %139 = vmatpush1.bf16.msra.mxu0 0
    %140 = vmatprep.subr.bf16.mxu0 0
    %141 = vmatpush1.bf16.msra.mxu0 0
    %142 = vmatprep.subr.bf16.mxu0 0
    %143 = vmatpush1.bf16.msra.mxu0 0
    %144 = vmatprep.mubr.bf16.mxu0 0
    %145 = vmatmul.mubr.bf16.gmra.mrb[0].mxu0 %v106
    %v146 = vpop.f32.mrb[0].mxu0
    %v147 = vadd.f32 %v87, %v146
    %v148 = vpop.f32.mrb[0].mxu0
    %v149 = vpop.f32.mrb[0].mxu0
    %v150 = vpop.f32.mrb[0].mxu0
    %151 = vdwg.mxu0
    %v152 = vmax.f32 %v147, 0.0
    %v153 = vpack.c.bf16 %v152, %v152
    %v154 = vld [vmem:[#allocation5] sm:$0xf]
    %v155 = vld [vmem:[#allocation5 + $0x4] sm:$0xf]
    %v156 = vld [vmem:[#allocation5 + $0x8] sm:$0xf]
    %v157 = vld [vmem:[#allocation5 + $0xc] sm:$0xf]
    %v158 = vld [vmem:[#allocation5 + $0x10] sm:$0xf]
    %v159 = vld [vmem:[#allocation5 + $0x14] sm:$0xf]
    %v160 = vld [vmem:[#allocation5 + $0x18] sm:$0xf]
    %v161 = vld [vmem:[#allocation5 + $0x1c] sm:$0xf]
    %v162 = vld [vmem:[#allocation5 + $0x20] sm:$0xf]
    %v163 = vld [vmem:[#allocation5 + $0x24] sm:$0xf]
    %v164 = vld [vmem:[#allocation5 + $0x28] sm:$0xf]
    %v165 = vld [vmem:[#allocation5 + $0x2c] sm:$0xf]
    %v166 = vld [vmem:[#allocation5 + $0x30] sm:$0xf]
    %v167 = vld [vmem:[#allocation5 + $0x34] sm:$0xf]
    %v168 = vld [vmem:[#allocation5 + $0x38] sm:$0xf]
    %v169 = vld [vmem:[#allocation5 + $0x3c] sm:$0xf]
    %v170 = vld [vmem:[%s5] sm:$0x1]
    %v172 = vlaneseq
    %v173 = vshrl.u32 %v172, 7
    %v174 = vsub.s32 0, %v173
    %v175 = vrot.slane %v170, %v174
    %v193 = vunpack.c.l.b16 %v154
    %v194 = vunpack.c.l.b16 %v155
    %v195 = vunpack.c.l.b16 %v156
    %v196 = vunpack.c.l.b16 %v157
    %v197 = vunpack.c.l.b16 %v158
    %v198 = vunpack.c.l.b16 %v159
    %v199 = vunpack.c.l.b16 %v160
    %v200 = vunpack.c.l.b16 %v161
    %v201 = vunpack.c.l.b16 %v162
    %v202 = vunpack.c.l.b16 %v163
    %v203 = vunpack.c.l.b16 %v164
    %v204 = vunpack.c.l.b16 %v165
    %v205 = vunpack.c.l.b16 %v166
    %v206 = vunpack.c.l.b16 %v167
    %v207 = vunpack.c.l.b16 %v168
    %v208 = vunpack.c.l.b16 %v169
    %v209 = vpack.c.b16 %v194, %v193
    %v210 = vpack.c.b16 %v196, %v195
    %v211 = vpack.c.b16 %v198, %v197
    %v212 = vpack.c.b16 %v200, %v199
    %v213 = vpack.c.b16 %v202, %v201
    %v214 = vpack.c.b16 %v204, %v203
    %v215 = vpack.c.b16 %v206, %v205
    %v216 = vpack.c.b16 %v208, %v207
    %225 = vmatprep.subr.bf16.mxu0 0
    %226 = vmatpush1.bf16.msra.mxu0 %v209
    %227 = vmatprep.subr.bf16.mxu0 0
    %228 = vmatpush1.bf16.msra.mxu0 %v210
    %229 = vmatprep.subr.bf16.mxu0 0
    %230 = vmatpush1.bf16.msra.mxu0 %v211
    %231 = vmatprep.subr.bf16.mxu0 0
    %232 = vmatpush1.bf16.msra.mxu0 %v212
    %233 = vmatprep.subr.bf16.mxu0 0
    %234 = vmatpush1.bf16.msra.mxu0 %v213
    %235 = vmatprep.subr.bf16.mxu0 0
    %236 = vmatpush1.bf16.msra.mxu0 %v214
    %237 = vmatprep.subr.bf16.mxu0 0
    %238 = vmatpush1.bf16.msra.mxu0 %v215
    %239 = vmatprep.subr.bf16.mxu0 0
    %240 = vmatpush1.bf16.msra.mxu0 %v216
    %241 = vmatprep.subr.bf16.mxu0 0
    %242 = vmatpush1.bf16.msra.mxu0 0
    %243 = vmatprep.subr.bf16.mxu0 0
    %244 = vmatpush1.bf16.msra.mxu0 0
    %245 = vmatprep.subr.bf16.mxu0 0
    %246 = vmatpush1.bf16.msra.mxu0 0
    %247 = vmatprep.subr.bf16.mxu0 0
    %248 = vmatpush1.bf16.msra.mxu0 0
    %249 = vmatprep.subr.bf16.mxu0 0
    %250 = vmatpush1.bf16.msra.mxu0 0
    %251 = vmatprep.subr.bf16.mxu0 0
    %252 = vmatpush1.bf16.msra.mxu0 0
    %253 = vmatprep.subr.bf16.mxu0 0
    %254 = vmatpush1.bf16.msra.mxu0 0
    %255 = vmatprep.subr.bf16.mxu0 0
    %256 = vmatpush1.bf16.msra.mxu0 0
    %257 = vmatprep.mubr.bf16.mxu0 0
    %258 = vmatmul.mubr.bf16.gmra.mrb[0].mxu0 %v153
    %v259 = vpop.f32.mrb[0].mxu0
    %v260 = vadd.f32 %v175, %v259
    %v261 = vpop.f32.mrb[0].mxu0
    %v262 = vpop.f32.mrb[0].mxu0
    %v263 = vpop.f32.mrb[0].mxu0
    %264 = vdwg.mxu0
    %265 = vst [vmem:[#allocation7] sm:$0xff] %v260
    // Predicated region
    $region34: #{tpu_custom_call.1} parent=1 // pred_check
      _
    $region35: #{tpu_custom_call.1} parent=1 // pred_check_branch
      %267 = sbr.rel (0) target = $region37
    $region36: #{tpu_custom_call.1} parent=1 // pred_region
      %s269 = ssub.s32 128, 128
      %270 = vsyncadd [#allocation4], %s269
      %s272 = sshll.u32 [#allocation7], 4
      %s273 = int_to_ptr.vmem [resolvable:$true] %s272
      %275 = dma.vmem_to_hbm [thread:$0]  %s273, 128, %s6, [#allocation4]
    $region37: #{tpu_custom_call.1} parent=1 // pred_fallthru
      _
    // Predicated region
    $region38: #{tpu_custom_call.1} parent=1 // pred_check
      _
    $region39: #{tpu_custom_call.1} parent=1 // pred_check_branch
      %277 = sbr.rel (0) target = $region41
    $region40: #{tpu_custom_call.1} parent=1 // pred_region
      %278 = dma.done [#allocation4], 128
    $region41: #{tpu_custom_call.1} parent=1 // pred_fallthru
      _
    %279 = vsyncpa [#allocation3], 1
    %280 = vsyncpa [#allocation6], 1
    %281 = vsyncpa [#allocation4], 1

</llo_original>
